<compile_context>
chip_gen: v6e
topology: v6e:2x2x1
jax: 0.10.0
libtpu: 0.0.40
codegen_flags: <defaults>
</compile_context>

<pallas_src>
import functools

import jax
import jax.numpy as jnp
from jax.experimental import pallas as pl
from jax.experimental.pallas import tpu as pltpu


def efm_kernel(ucat_ref, icat_ref, bias_ref, w_ref, out_ref):
    """Per-tile body: pure VPU multiply-reduce over two (TB, 2D) streams."""
    u = ucat_ref[...]          # (TB, 2D) = [user_2 | user] rows
    it = icat_ref[...]         # (TB, 2D) = [item_2 | item] rows
    w = w_ref[...]             # (1, 2D)  = [0_D | sum of selected aspect rows]

    # rating = sum(cat(u2,u) * cat(i2,i), axis=1) + item_bias
    rating = jnp.sum(u * it, axis=1, keepdims=True) + bias_ref[...]
    # X[:, idx].sum(1) == u . (sum_j aspect_W[idx_j])  (exact up to FP order)
    xi = jnp.sum(u * w, axis=1, keepdims=True)
    yi = jnp.sum(it * w, axis=1, keepdims=True)

    # Single store per tile -> one output DMA stream.
    # TODO(synk): a (3, Bp) lane-dense output (block (3, tb)) would make the
    # store fully unmasked; skipped because the output is ~1% of the traffic.
    out_ref[...] = jnp.concatenate([rating, xi, yi], axis=1)


def _choose_tile(batch, d2, block_b):
    """Pick the batch tile.  Budget the two double-buffered (tb, 2D) f32 input
    streams to ~8 MiB so the pipeline keeps full depth even on v7x's 64 MiB
    VMEM (32 MiB scoped default) without raising vmem_limit_bytes."""
    budget = 8 * 1024 * 1024
    max_tb = budget // (2 * 2 * d2 * 4)          # 2 streams x 2 buffers x 4B
    max_tb = max(8, (max_tb // 8) * 8)
    tb = min(block_b, max_tb)
    if batch <= tb:
        return batch, batch
    bp = pl.cdiv(batch, tb) * tb
    return tb, bp


def prepare_efm_params(params):
    """One-time parameter prep: pre-concatenate the paired embedding tables."""
    return {
        "user_cat": jnp.concatenate(
            [params["embedding_user_2"], params["embedding_user"]], axis=1),
        "item_cat": jnp.concatenate(
            [params["embedding_item_2"], params["embedding_item"]], axis=1),
        "embedding_aspect": params["embedding_aspect"],
        "item_bias": params["item_bias"],
    }


def efm_forward(prepared, user_indices, item_indices, aspect_indices, *,
                block_b=1024, dimension_semantics=("parallel",)):
    """Embedding gathers in XLA + Pallas streaming kernel for the hot path."""
    user_cat = prepared["user_cat"]      # (num_users, 2D)
    item_cat = prepared["item_cat"]      # (num_items, 2D)
    d2 = user_cat.shape[1]
    d = d2 // 2
    B = user_indices.shape[0]

    tb, Bp = _choose_tile(B, d2, block_b)

    # Pad the cheap int32 index vectors (NOT the gathered float arrays) so the
    # gathers below emit tile-aligned (Bp, 2D) arrays directly.
    if Bp != B:
        pad = Bp - B
        user_indices = jnp.pad(user_indices, (0, pad))   # index 0 is valid
        item_indices = jnp.pad(item_indices, (0, pad))

    # Row gathers stay in XLA for now (see TODO at top about fusing them).
    ucat = jnp.take(user_cat, user_indices, axis=0)                 # (Bp, 2D)
    icat = jnp.take(item_cat, item_indices, axis=0)                 # (Bp, 2D)
    bias = jnp.take(prepared["item_bias"], item_indices, axis=0)    # (Bp, 1)

    # w_eff = sum over selected aspect rows (duplicates counted); zero-pad the
    # left half so the kernel applies it to the concatenated stream unsliced.
    w_eff = jnp.take(prepared["embedding_aspect"], aspect_indices, axis=0)
    w_eff = w_eff.sum(axis=0, keepdims=True).astype(jnp.float32)    # (1, D)
    w_full = jnp.concatenate(
        [jnp.zeros((1, d), jnp.float32), w_eff], axis=1)            # (1, 2D)

    grid = (Bp // tb,)
    row_spec = lambda width: pl.BlockSpec((tb, width), lambda i: (i, 0))

    out = pl.pallas_call(
        efm_kernel,
        out_shape=jax.ShapeDtypeStruct((Bp, 3), jnp.float32),
        grid=grid,
        in_specs=[
            row_spec(d2),                              # [user_2 | user] rows
            row_spec(d2),                              # [item_2 | item] rows
            row_spec(1),                               # item_bias rows
            pl.BlockSpec((1, d2), lambda i: (0, 0)),   # w_full (resident)
        ],
        out_specs=row_spec(3),
        compiler_params=pltpu.CompilerParams(
            dimension_semantics=dimension_semantics),
    )(ucat, icat, bias, w_full)

    out = out[:B]
    return out[:, 0], out[:, 1], out[:, 2]


def init_params(key, num_users, num_items, num_aspect, latent_dim):
    """Deterministic synthetic parameters (torch nn.Embedding default ~ N(0,1);
    item_bias zero-initialized exactly like the PyTorch module)."""
    ks = jax.random.split(key, 5)
    return {
        "embedding_user": jax.random.normal(ks[0], (num_users, latent_dim), jnp.float32),
        "embedding_item": jax.random.normal(ks[1], (num_items, latent_dim), jnp.float32),
        "embedding_aspect": jax.random.normal(ks[2], (num_aspect, latent_dim), jnp.float32),
        "embedding_user_2": jax.random.normal(ks[3], (num_users, latent_dim), jnp.float32),
        "embedding_item_2": jax.random.normal(ks[4], (num_items, latent_dim), jnp.float32),
        "item_bias": jnp.zeros((num_items, 1), jnp.float32),
    }


def efm_forward_ref(params, user_indices, item_indices, aspect_indices):
    """Pure-JAX reference mirroring the PyTorch forward exactly."""
    u2 = params["embedding_user_2"][user_indices]
    i2 = params["embedding_item_2"][item_indices]
    u = params["embedding_user"][user_indices]
    it = params["embedding_item"][item_indices]
    ur = jnp.concatenate([u2, u], axis=1)
    ir = jnp.concatenate([i2, it], axis=1)
    elem = jnp.sum(ur * ir, axis=1)
    bias = params["item_bias"][item_indices][:, 0]
    hi = jax.lax.Precision.HIGHEST   # keep the reference in true f32 on the MXU
    X = jnp.dot(u, params["embedding_aspect"].T, precision=hi)
    Y = jnp.dot(it, params["embedding_aspect"].T, precision=hi)
    x_ind = X[:, aspect_indices].sum(axis=1)
    y_ind = Y[:, aspect_indices].sum(axis=1)
    return elem + bias, x_ind, y_ind


def _check(params, uidx, iidx, aidx, *, block_b=1024):
    prepared = prepare_efm_params(params)
    fwd = jax.jit(functools.partial(efm_forward, block_b=block_b))
    r, x, y = fwd(prepared, uidx, iidx, aidx)
    jax.block_until_ready((r, x, y))
    r_ref, x_ref, y_ref = efm_forward_ref(params, uidx, iidx, aidx)
    assert r.shape == r_ref.shape and x.shape == x_ref.shape and y.shape == y_ref.shape
    assert jnp.allclose(r, r_ref, atol=1e-3, rtol=1e-4), "rating mismatch"
    assert jnp.allclose(x, x_ref, atol=2e-3, rtol=2e-4), "X_indiced mismatch"
    assert jnp.allclose(y, y_ref, atol=2e-3, rtol=2e-4), "Y_indiced mismatch"


if __name__ == "__main__":
    key = jax.random.PRNGKey(0)

    # --- small demo shapes (single tile, 2D = 64) ---
    num_users, num_items, num_aspect, latent_dim = 12, 10, 16, 32
    batch, n_sel = 8, 8
    pkey, k1, k2, k3, key = jax.random.split(key, 5)
    params = init_params(pkey, num_users, num_items, num_aspect, latent_dim)
    uidx = jax.random.randint(k1, (batch,), 0, num_users, dtype=jnp.int32)
    iidx = jax.random.randint(k2, (batch,), 0, num_items, dtype=jnp.int32)
    aidx = jax.random.randint(k3, (n_sel,), 0, num_aspect, dtype=jnp.int32)
    _check(params, uidx, iidx, aidx)

    # --- larger batch: lane-dense 2D = 128 streams, multi-tile grid, ragged
    #     final block handled by padding only the index vectors ---
    num_users2, num_items2, num_aspect2, latent_dim2 = 64, 48, 24, 64
    batch2, n_sel2 = 2500, 40        # pads to 3072 with the default TB = 1024
    pkey2, k4, k5, k6 = jax.random.split(key, 4)
    params2 = init_params(pkey2, num_users2, num_items2, num_aspect2, latent_dim2)
    uidx2 = jax.random.randint(k4, (batch2,), 0, num_users2, dtype=jnp.int32)
    iidx2 = jax.random.randint(k5, (batch2,), 0, num_items2, dtype=jnp.int32)
    aidx2 = jax.random.randint(k6, (n_sel2,), 0, num_aspect2, dtype=jnp.int32)
    _check(params2, uidx2, iidx2, aidx2)

    print("KERNEL_OK")
</pallas_src>

<mosaic_0001>
module attributes {stable_mosaic.version = 11 : i64} {
  func.func @efm_kernel(%arg0: i32, %arg1: memref<8x64xf32, #tpu.memory_space<vmem>>, %arg2: memref<8x64xf32, #tpu.memory_space<vmem>>, %arg3: memref<8x1xf32, #tpu.memory_space<vmem>>, %arg4: memref<1x64xf32, #tpu.memory_space<vmem>>, %arg5: memref<8x3xf32, #tpu.memory_space<vmem>>) attributes {dimension_semantics = [#tpu.dimension_semantics<parallel>], iteration_bounds = array<i64: 1>, scalar_prefetch = 0 : i64, scratch_operands = 0 : i64, tpu.core_type = #tpu.core_type<tc>, window_params = [{transform_indices = @transform_0, window_bounds = array<i64: 8, 64>}, {transform_indices = @transform_1, window_bounds = array<i64: 8, 64>}, {transform_indices = @transform_2, window_bounds = array<i64: 8, 1>}, {pipeline_mode = #tpu.pipeline_mode<synchronous>, transform_indices = @transform_3, window_bounds = array<i64: 1, 64>}, {transform_indices = @transform_4, window_bounds = array<i64: 8, 3>}]} {
    %c0 = arith.constant 0 : index
    %c0_0 = arith.constant 0 : index
    %0 = vector.load %arg1[%c0, %c0_0] : memref<8x64xf32, #tpu.memory_space<vmem>>, vector<8x64xf32>
    %c0_1 = arith.constant 0 : index
    %c0_2 = arith.constant 0 : index
    %1 = vector.load %arg2[%c0_1, %c0_2] : memref<8x64xf32, #tpu.memory_space<vmem>>, vector<8x64xf32>
    %c0_3 = arith.constant 0 : index
    %c0_4 = arith.constant 0 : index
    %2 = vector.load %arg4[%c0_3, %c0_4] : memref<1x64xf32, #tpu.memory_space<vmem>>, vector<1x64xf32>
    %3 = arith.mulf %0, %1 : vector<8x64xf32>
    %cst = arith.constant dense<0.000000e+00> : vector<8xf32>
    %4 = vector.multi_reduction <add>, %3, %cst [1] : vector<8x64xf32> to vector<8xf32>
    %5 = vector.shape_cast %4 : vector<8xf32> to vector<8x1xf32>
    %c0_5 = arith.constant 0 : index
    %c0_6 = arith.constant 0 : index
    %6 = vector.load %arg3[%c0_5, %c0_6] : memref<8x1xf32, #tpu.memory_space<vmem>>, vector<8x1xf32>
    %7 = arith.addf %5, %6 : vector<8x1xf32>
    %8 = vector.broadcast %2 : vector<1x64xf32> to vector<8x64xf32>
    %9 = arith.mulf %0, %8 : vector<8x64xf32>
    %cst_7 = arith.constant dense<0.000000e+00> : vector<8xf32>
    %10 = vector.multi_reduction <add>, %9, %cst_7 [1] : vector<8x64xf32> to vector<8xf32>
    %11 = vector.shape_cast %10 : vector<8xf32> to vector<8x1xf32>
    %12 = vector.broadcast %2 : vector<1x64xf32> to vector<8x64xf32>
    %13 = arith.mulf %1, %12 : vector<8x64xf32>
    %cst_8 = arith.constant dense<0.000000e+00> : vector<8xf32>
    %14 = vector.multi_reduction <add>, %13, %cst_8 [1] : vector<8x64xf32> to vector<8xf32>
    %15 = vector.shape_cast %14 : vector<8xf32> to vector<8x1xf32>
    %16 = tpu.concatenate %7, %11, %15 in 1 : vector<8x1xf32>, vector<8x1xf32>, vector<8x1xf32> -> vector<8x3xf32>
    %c0_9 = arith.constant 0 : index
    %c0_10 = arith.constant 0 : index
    %17 = vector.load %arg5[%c0_9, %c0_10] : memref<8x3xf32, #tpu.memory_space<vmem>>, vector<8x3xf32>
    tpu.vector_store %arg5[%c0_9, %c0_10], %16 {strides = array<i32>} : memref<8x3xf32, #tpu.memory_space<vmem>>, vector<8x3xf32>,
    return
  }
  func.func @transform_0(%arg0: i32) -> (i32, i32) {
    %c0_i32 = arith.constant 0 : i32
    %c0_i32_0 = arith.constant 0 : i32
    return %arg0, %c0_i32 : i32, i32
  }
  func.func @transform_1(%arg0: i32) -> (i32, i32) {
    %c0_i32 = arith.constant 0 : i32
    %c0_i32_0 = arith.constant 0 : i32
    return %arg0, %c0_i32 : i32, i32
  }
  func.func @transform_2(%arg0: i32) -> (i32, i32) {
    %c0_i32 = arith.constant 0 : i32
    %c0_i32_0 = arith.constant 0 : i32
    return %arg0, %c0_i32 : i32, i32
  }
  func.func @transform_3(%arg0: i32) -> (i32, i32) {
    %c0_i32 = arith.constant 0 : i32
    %c0_i32_0 = arith.constant 0 : i32
    %c0_i32_1 = arith.constant 0 : i32
    return %c0_i32, %c0_i32_0 : i32, i32
  }
  func.func @transform_4(%arg0: i32) -> (i32, i32) {
    %c0_i32 = arith.constant 0 : i32
    %c0_i32_0 = arith.constant 0 : i32
    return %arg0, %c0_i32 : i32, i32
  }
}

</mosaic_0001>

<llo_original>
// kernel: efm_forward.1
$region0: #{efm_forward.1}
  #allocation0 [shape = 'u32[]', space=smem, size = 0x4, offset = 0x4, fixed_abs, tag = 'smem constant byte address 0x4 - core index']
  #allocation1 [shape = 'u32[144,128]{1,0:T(1,128)}', space=vmem, size = 0x12000, scoped, tag = 'internal scratch']
  %s0 = inlined_call_operand.vmem [shape: f32[8,64], index: 0, kind: input, shape index: {}]
  %s1 = inlined_call_operand.vmem [shape: f32[8,64], index: 1, kind: input, shape index: {}]
  %s2 = inlined_call_operand.vmem [shape: f32[8,1], index: 2, kind: input, shape index: {}]
  %s3 = inlined_call_operand.vmem [shape: f32[1,64], index: 3, kind: input, shape index: {}]
  %s4 = inlined_call_operand.vmem [shape: f32[8,3], index: 4, kind: output, shape index: {}]
  %s5 = sld [smem:[#allocation0]]
  $region26: #{efm_forward.1} parent=0
    _
  %s7 = ssub.s32 1, %s5
  %s8 = scalar_select 0, %s7, %s5
  // Predicated region
  $region2: #{efm_forward.1} parent=0 // pred_check
    _
  $region3: #{efm_forward.1} parent=0 // pred_check_branch
    %10 = sbr.rel (0) target = $region5
  $region4: #{efm_forward.1} parent=0 // pred_region
    _
  $region5: #{efm_forward.1} parent=0 // pred_fallthru
    _
  // Predicated region
  $region6: #{efm_forward.1} parent=0 // pred_check
    _
  $region7: #{efm_forward.1} parent=0 // pred_check_branch
    %12 = sbr.rel (0) target = $region9
  $region8: #{efm_forward.1} parent=0 // pred_region
    _
  $region9: #{efm_forward.1} parent=0 // pred_fallthru
    _
  // Predicated region
  $region10: #{efm_forward.1} parent=0 // pred_check
    _
  $region11: #{efm_forward.1} parent=0 // pred_check_branch
    %14 = sbr.rel (0) target = $region13
  $region12: #{efm_forward.1} parent=0 // pred_region
    _
  $region13: #{efm_forward.1} parent=0 // pred_fallthru
    _
  // Predicated region
  $region14: #{efm_forward.1} parent=0 // pred_check
    _
  $region15: #{efm_forward.1} parent=0 // pred_check_branch
    %16 = sbr.rel (0) target = $region17
  $region16: #{efm_forward.1} parent=0 // pred_region
    _
  $region17: #{efm_forward.1} parent=0 // pred_fallthru
    _
  %v17 = vld [vmem:[%s0] sm:$0xff]
  %v18 = vld [vmem:[%s1] sm:$0xff]
  %v19 = vld [vmem:[%s3] sm:$0x1]
  %v20 = vmul.f32 %v17, %v18
  %vm21 = vcmask 523264
  %v22 = vsel %vm21, %v20, 0.0
  %23 = vadd.xlane.f32.xlu0 %v22
  %v24 = vpop.xlane.xlu0 %23
  %v25 = vld [vmem:[%s2] sm:$0xff]
  %v26 = vadd.f32 %v24, %v25
  %v28 = vlaneseq
  %v29 = vshrl.u32 %v28, 7
  %v30 = vsub.s32 0, %v29
  %v31 = vrot.slane %v19, %v30
  %v33 = vmul.f32 %v17, %v31
  %v34 = vsel %vm21, %v33, 0.0
  %35 = vadd.xlane.f32.xlu0 %v34
  %v36 = vpop.xlane.xlu0 %35
  %v37 = vmul.f32 %v18, %v31
  %v38 = vsel %vm21, %v37, 0.0
  %39 = vadd.xlane.f32.xlu0 %v38
  %v40 = vpop.xlane.xlu0 %39
  %vm41 = vcmask 7168
  %v42 = vsel %vm41, %v26, %v36
  %vm43 = vcmask 15360
  %v44 = vsel %vm43, %v42, %v40
  %vm45 = vcmask 23552
  %46 = vst.msk [vmem:[%s4] sm:$0xff] %vm45, %v44
  // Predicated region
  $region18: #{efm_forward.1} parent=0 // pred_check
    _
  $region19: #{efm_forward.1} parent=0 // pred_check_branch
    %48 = sbr.rel (0) target = $region21
  $region20: #{efm_forward.1} parent=0 // pred_region
    _
  $region21: #{efm_forward.1} parent=0 // pred_fallthru
    _
  // Predicated region
  $region22: #{efm_forward.1} parent=0 // pred_check
    _
  $region23: #{efm_forward.1} parent=0 // pred_check_branch
    %50 = sbr.rel (0) target = $region25
  $region24: #{efm_forward.1} parent=0 // pred_region
    _
  $region25: #{efm_forward.1} parent=0 // pred_fallthru
    _

</llo_original>
